<compile_context>
chip_gen: v7x
topology: tpu7x:2x2x1
jax: 0.10.0
libtpu: 0.0.40
codegen_flags: <defaults>
</compile_context>

<pallas_src>
import functools

import jax
import jax.numpy as jnp
from jax import lax
from jax.experimental import pallas as pl
from jax.experimental.pallas import tpu as pltpu


def hifn_kernel(x_ref,
                gw0_ref, gb0_ref, gw1_ref, gb1_ref, gw2_ref, gb2_ref,
                mw0_ref, mb0_ref, mw1_ref, mb1_ref, mw2_ref, mb2_ref,
                mw3_ref, mb3_ref,
                o_ref, *, compute_dtype):
    """Whole HIFN forward (BN pre-folded into gate layer 0) for one batch tile."""
    x = x_ref[...].astype(jnp.float32)                       # (TB, D)

    def dense(h, w_ref, b_ref, relu):
        # MXU matmul in compute_dtype (bf16 on v6e/v7x), f32 accumulation; bias in f32.
        y = jnp.dot(h.astype(compute_dtype), w_ref[...],
                    preferred_element_type=jnp.float32) + b_ref[...]
        return jnp.maximum(y, 0.0) if relu else y

    # ---- gate MLP on BN(x): BN scale/shift already folded into (gw0, gb0) ----
    g = dense(x, gw0_ref, gb0_ref, relu=True)
    g = dense(g, gw1_ref, gb1_ref, relu=True)
    g = dense(g, gw2_ref, gb2_ref, relu=False)

    # ---- fusion with the *raw* input (done in f32 on the VPU) ----
    z = g * x

    # ---- main MLP ----
    h = dense(z, mw0_ref, mb0_ref, relu=True)
    h = dense(h, mw1_ref, mb1_ref, relu=True)
    h = dense(h, mw2_ref, mb2_ref, relu=True)
    out = dense(h, mw3_ref, mb3_ref, relu=False)

    o_ref[...] = out.astype(o_ref.dtype)


def _pick_batch_tile(B, tb):
    if tb is not None:
        assert B % tb == 0, "tb must divide B"
        return tb
    if B <= 512:
        return B                                  # single grid step for small batches
    for cand in range(512, 0, -8):                # largest multiple-of-8 divisor <= 512
        if B % cand == 0:
            return cand
    return B


def hifn_forward(x, bn, gate_params, mlp_params, *, tb=None, use_bf16=True):
    B, D = x.shape
    compute_dtype = jnp.bfloat16 if use_bf16 else jnp.float32
    tb = _pick_batch_tile(B, tb)

    # ---- fold eval-mode BatchNorm into the first gate Linear (constant work) ----
    gamma, beta, mean, var = bn[0], bn[1], bn[2], bn[3]
    scale = gamma * lax.rsqrt(var + jnp.float32(1e-5))        # (D,)
    shift = beta - mean * scale                               # (D,)
    gw0, gb0 = gate_params[0]
    gw0_folded = scale[:, None] * gw0                         # (D, H0)
    gb0_folded = gb0 + shift[None, :] @ gw0                   # (1, H0)
    layers = [(gw0_folded, gb0_folded)] + list(gate_params[1:]) + list(mlp_params)

    # Weights cast once to the MXU compute dtype; biases stay f32 (added post-accum).
    weights = [w.astype(compute_dtype) for (w, _) in layers]
    biases = [b.astype(jnp.float32) for (_, b) in layers]

    # ---- specs: x/out tiled over batch; constants whole-array VMEM (no double-buffer) ----
    const_spec = pl.BlockSpec(memory_space=pltpu.MemorySpace.VMEM)
    in_specs = [pl.BlockSpec((tb, D), lambda i: (i, 0))]
    args = [x]
    for w, b in zip(weights, biases):
        in_specs += [const_spec, const_spec]
        args += [w, b]

    # ---- advisory cost estimate for XLA's scheduler ----
    flops = int(sum(2 * B * w.shape[0] * w.shape[1] for w in weights))
    bytes_accessed = int(
        x.size * x.dtype.itemsize + B * D * 4
        + sum(w.size * w.dtype.itemsize for w in weights)
        + sum(b.size * 4 for b in biases))
    cost = pl.CostEstimate(flops=flops, transcendentals=0,
                           bytes_accessed=bytes_accessed)

    return pl.pallas_call(
        functools.partial(hifn_kernel, compute_dtype=compute_dtype),
        out_shape=jax.ShapeDtypeStruct((B, D), x.dtype),
        grid=(B // tb,),
        in_specs=in_specs,
        out_specs=pl.BlockSpec((tb, D), lambda i: (i, 0)),
        compiler_params=pltpu.CompilerParams(
            dimension_semantics=("parallel",)),   # batch axis is independent
        cost_estimate=cost,
    )(*args)


# ----------------------------- parameter setup -----------------------------

def init_linear(key, fan_in, fan_out):
    """PyTorch-style uniform(-1/sqrt(fan_in), 1/sqrt(fan_in)) init, [in, out] layout."""
    kw, kb = jax.random.split(key)
    bound = 1.0 / jnp.sqrt(jnp.float32(fan_in))
    w = jax.random.uniform(kw, (fan_in, fan_out), jnp.float32, -bound, bound)
    b = jax.random.uniform(kb, (1, fan_out), jnp.float32, -bound, bound)
    return w, b


def init_mlp(key, sizes):
    """sizes = [in, h0, h1, ..., out] -> list of (W, b)."""
    keys = jax.random.split(key, len(sizes) - 1)
    return [init_linear(k, sizes[i], sizes[i + 1]) for i, k in enumerate(keys)]


def reference_forward(x, bn, gate_params, mlp_params):
    gamma, beta, mean, var = bn[0], bn[1], bn[2], bn[3]
    e_ctx = (x - mean) / jnp.sqrt(var + 1e-5) * gamma + beta

    def run_mlp(h, params):
        for li, (w, b) in enumerate(params):
            h = h @ w + b
            if li < len(params) - 1:
                h = jnp.maximum(h, 0.0)
        return h

    g = run_mlp(e_ctx, gate_params)
    return run_mlp(g * x, mlp_params)


if __name__ == "__main__":
    # Small shapes consistent with HIFN: hifn_input_size=16,
    # dnn_hidden_sizes=[128, 64, 32], gate_hidden_sizes=[128, 64], batch=16.
    B, D = 16, 16
    GATE_SIZES = [D, 128, 64, D]
    MLP_SIZES = [D, 128, 64, 32, D]

    key = jax.random.PRNGKey(0)
    kx, kbn, kgate, kmlp = jax.random.split(key, 4)

    x = jax.random.normal(kx, (B, D), jnp.float32)

    # BatchNorm params packed as rows: [gamma; beta; running_mean; running_var]
    kg, kb2, km, kv = jax.random.split(kbn, 4)
    gamma = 1.0 + 0.1 * jax.random.normal(kg, (D,), jnp.float32)
    beta = 0.1 * jax.random.normal(kb2, (D,), jnp.float32)
    rmean = 0.1 * jax.random.normal(km, (D,), jnp.float32)
    rvar = 1.0 + 0.1 * jax.random.uniform(kv, (D,), jnp.float32)
    bn = jnp.stack([gamma, beta, rmean, rvar], axis=0)   # [4, D]

    gate_params = init_mlp(kgate, GATE_SIZES)
    mlp_params = init_mlp(kmlp, MLP_SIZES)

    ref = reference_forward(x, bn, gate_params, mlp_params)

    # f32 path: tight check (validates BN folding + kernel plumbing exactly).
    out_f32 = jax.block_until_ready(
        hifn_forward(x, bn, gate_params, mlp_params, use_bf16=False))
    assert out_f32.shape == (B, D)
    assert jnp.allclose(out_f32, ref, atol=1e-4, rtol=1e-4)

    # bf16-MXU path (production path on v6e/v7x): f32 accumulation, looser tolerance.
    out_bf16 = jax.block_until_ready(
        hifn_forward(x, bn, gate_params, mlp_params, use_bf16=True))
    assert out_bf16.shape == (B, D)
    assert jnp.allclose(out_bf16, ref, atol=5e-2, rtol=5e-2)

    print("KERNEL_OK")
</pallas_src>

<mosaic_0001>
module attributes {stable_mosaic.version = 11 : i64} {
  func.func @hifn_kernel(%arg0: i32, %arg1: memref<16x16xf32, #tpu.memory_space<vmem>>, %arg2: memref<16x128xf32, #tpu.memory_space<vmem>>, %arg3: memref<1x128xf32, #tpu.memory_space<vmem>>, %arg4: memref<128x64xf32, #tpu.memory_space<vmem>>, %arg5: memref<1x64xf32, #tpu.memory_space<vmem>>, %arg6: memref<64x16xf32, #tpu.memory_space<vmem>>, %arg7: memref<1x16xf32, #tpu.memory_space<vmem>>, %arg8: memref<16x128xf32, #tpu.memory_space<vmem>>, %arg9: memref<1x128xf32, #tpu.memory_space<vmem>>, %arg10: memref<128x64xf32, #tpu.memory_space<vmem>>, %arg11: memref<1x64xf32, #tpu.memory_space<vmem>>, %arg12: memref<64x32xf32, #tpu.memory_space<vmem>>, %arg13: memref<1x32xf32, #tpu.memory_space<vmem>>, %arg14: memref<32x16xf32, #tpu.memory_space<vmem>>, %arg15: memref<1x16xf32, #tpu.memory_space<vmem>>, %arg16: memref<16x16xf32, #tpu.memory_space<vmem>>) attributes {dimension_semantics = [#tpu.dimension_semantics<parallel>], iteration_bounds = array<i64: 1>, scalar_prefetch = 0 : i64, scratch_operands = 0 : i64, tpu.core_type = #tpu.core_type<tc>, window_params = [{transform_indices = @transform_0, window_bounds = array<i64: 16, 16>}, {pipeline_mode = #tpu.pipeline_mode<synchronous>, transform_indices = @transform_1, window_bounds = array<i64: 16, 128>}, {pipeline_mode = #tpu.pipeline_mode<synchronous>, transform_indices = @transform_2, window_bounds = array<i64: 1, 128>}, {pipeline_mode = #tpu.pipeline_mode<synchronous>, transform_indices = @transform_3, window_bounds = array<i64: 128, 64>}, {pipeline_mode = #tpu.pipeline_mode<synchronous>, transform_indices = @transform_4, window_bounds = array<i64: 1, 64>}, {pipeline_mode = #tpu.pipeline_mode<synchronous>, transform_indices = @transform_5, window_bounds = array<i64: 64, 16>}, {pipeline_mode = #tpu.pipeline_mode<synchronous>, transform_indices = @transform_6, window_bounds = array<i64: 1, 16>}, {pipeline_mode = #tpu.pipeline_mode<synchronous>, transform_indices = @transform_7, window_bounds = array<i64: 16, 128>}, {pipeline_mode = #tpu.pipeline_mode<synchronous>, transform_indices = @transform_8, window_bounds = array<i64: 1, 128>}, {pipeline_mode = #tpu.pipeline_mode<synchronous>, transform_indices = @transform_9, window_bounds = array<i64: 128, 64>}, {pipeline_mode = #tpu.pipeline_mode<synchronous>, transform_indices = @transform_10, window_bounds = array<i64: 1, 64>}, {pipeline_mode = #tpu.pipeline_mode<synchronous>, transform_indices = @transform_11, window_bounds = array<i64: 64, 32>}, {pipeline_mode = #tpu.pipeline_mode<synchronous>, transform_indices = @transform_12, window_bounds = array<i64: 1, 32>}, {pipeline_mode = #tpu.pipeline_mode<synchronous>, transform_indices = @transform_13, window_bounds = array<i64: 32, 16>}, {pipeline_mode = #tpu.pipeline_mode<synchronous>, transform_indices = @transform_14, window_bounds = array<i64: 1, 16>}, {transform_indices = @transform_15, window_bounds = array<i64: 16, 16>}]} {
    %c0 = arith.constant 0 : index
    %c0_0 = arith.constant 0 : index
    %0 = vector.load %arg1[%c0, %c0_0] : memref<16x16xf32, #tpu.memory_space<vmem>>, vector<16x16xf32>
    %c0_1 = arith.constant 0 : index
    %c0_2 = arith.constant 0 : index
    %1 = vector.load %arg2[%c0_1, %c0_2] : memref<16x128xf32, #tpu.memory_space<vmem>>, vector<16x128xf32>
    %cst = arith.constant dense<0.000000e+00> : vector<16x128xf32>
    %2 = tpu.matmul %0, %1, %cst {dimension_numbers = #tpu.dot_dimension_numbers<[1], [0], [0], [1], [0, 0, 1, 1], [], []>} : vector<16x16xf32>, vector<16x128xf32>, vector<16x128xf32> -> vector<16x128xf32>
    %c0_3 = arith.constant 0 : index
    %c0_4 = arith.constant 0 : index
    %3 = vector.load %arg3[%c0_3, %c0_4] : memref<1x128xf32, #tpu.memory_space<vmem>>, vector<1x128xf32>
    %4 = vector.broadcast %3 : vector<1x128xf32> to vector<16x128xf32>
    %5 = arith.addf %2, %4 : vector<16x128xf32>
    %cst_5 = arith.constant 0.000000e+00 : f32
    %6 = vector.broadcast %cst_5 : f32 to vector<16x128xf32>
    %7 = arith.maximumf %5, %6 : vector<16x128xf32>
    %c0_6 = arith.constant 0 : index
    %c0_7 = arith.constant 0 : index
    %8 = vector.load %arg4[%c0_6, %c0_7] : memref<128x64xf32, #tpu.memory_space<vmem>>, vector<128x64xf32>
    %cst_8 = arith.constant dense<0.000000e+00> : vector<16x64xf32>
    %9 = tpu.matmul %7, %8, %cst_8 {dimension_numbers = #tpu.dot_dimension_numbers<[1], [0], [0], [1], [0, 0, 1, 1], [], []>} : vector<16x128xf32>, vector<128x64xf32>, vector<16x64xf32> -> vector<16x64xf32>
    %c0_9 = arith.constant 0 : index
    %c0_10 = arith.constant 0 : index
    %10 = vector.load %arg5[%c0_9, %c0_10] : memref<1x64xf32, #tpu.memory_space<vmem>>, vector<1x64xf32>
    %11 = vector.broadcast %10 : vector<1x64xf32> to vector<16x64xf32>
    %12 = arith.addf %9, %11 : vector<16x64xf32>
    %cst_11 = arith.constant 0.000000e+00 : f32
    %13 = vector.broadcast %cst_11 : f32 to vector<16x64xf32>
    %14 = arith.maximumf %12, %13 : vector<16x64xf32>
    %c0_12 = arith.constant 0 : index
    %c0_13 = arith.constant 0 : index
    %15 = vector.load %arg6[%c0_12, %c0_13] : memref<64x16xf32, #tpu.memory_space<vmem>>, vector<64x16xf32>
    %cst_14 = arith.constant dense<0.000000e+00> : vector<16x16xf32>
    %16 = tpu.matmul %14, %15, %cst_14 {dimension_numbers = #tpu.dot_dimension_numbers<[1], [0], [0], [1], [0, 0, 1, 1], [], []>} : vector<16x64xf32>, vector<64x16xf32>, vector<16x16xf32> -> vector<16x16xf32>
    %c0_15 = arith.constant 0 : index
    %c0_16 = arith.constant 0 : index
    %17 = vector.load %arg7[%c0_15, %c0_16] : memref<1x16xf32, #tpu.memory_space<vmem>>, vector<1x16xf32>
    %18 = vector.broadcast %17 : vector<1x16xf32> to vector<16x16xf32>
    %19 = arith.addf %16, %18 : vector<16x16xf32>
    %20 = arith.mulf %19, %0 : vector<16x16xf32>
    %c0_17 = arith.constant 0 : index
    %c0_18 = arith.constant 0 : index
    %21 = vector.load %arg8[%c0_17, %c0_18] : memref<16x128xf32, #tpu.memory_space<vmem>>, vector<16x128xf32>
    %cst_19 = arith.constant dense<0.000000e+00> : vector<16x128xf32>
    %22 = tpu.matmul %20, %21, %cst_19 {dimension_numbers = #tpu.dot_dimension_numbers<[1], [0], [0], [1], [0, 0, 1, 1], [], []>} : vector<16x16xf32>, vector<16x128xf32>, vector<16x128xf32> -> vector<16x128xf32>
    %c0_20 = arith.constant 0 : index
    %c0_21 = arith.constant 0 : index
    %23 = vector.load %arg9[%c0_20, %c0_21] : memref<1x128xf32, #tpu.memory_space<vmem>>, vector<1x128xf32>
    %24 = vector.broadcast %23 : vector<1x128xf32> to vector<16x128xf32>
    %25 = arith.addf %22, %24 : vector<16x128xf32>
    %cst_22 = arith.constant 0.000000e+00 : f32
    %26 = vector.broadcast %cst_22 : f32 to vector<16x128xf32>
    %27 = arith.maximumf %25, %26 : vector<16x128xf32>
    %c0_23 = arith.constant 0 : index
    %c0_24 = arith.constant 0 : index
    %28 = vector.load %arg10[%c0_23, %c0_24] : memref<128x64xf32, #tpu.memory_space<vmem>>, vector<128x64xf32>
    %cst_25 = arith.constant dense<0.000000e+00> : vector<16x64xf32>
    %29 = tpu.matmul %27, %28, %cst_25 {dimension_numbers = #tpu.dot_dimension_numbers<[1], [0], [0], [1], [0, 0, 1, 1], [], []>} : vector<16x128xf32>, vector<128x64xf32>, vector<16x64xf32> -> vector<16x64xf32>
    %c0_26 = arith.constant 0 : index
    %c0_27 = arith.constant 0 : index
    %30 = vector.load %arg11[%c0_26, %c0_27] : memref<1x64xf32, #tpu.memory_space<vmem>>, vector<1x64xf32>
    %31 = vector.broadcast %30 : vector<1x64xf32> to vector<16x64xf32>
    %32 = arith.addf %29, %31 : vector<16x64xf32>
    %cst_28 = arith.constant 0.000000e+00 : f32
    %33 = vector.broadcast %cst_28 : f32 to vector<16x64xf32>
    %34 = arith.maximumf %32, %33 : vector<16x64xf32>
    %c0_29 = arith.constant 0 : index
    %c0_30 = arith.constant 0 : index
    %35 = vector.load %arg12[%c0_29, %c0_30] : memref<64x32xf32, #tpu.memory_space<vmem>>, vector<64x32xf32>
    %cst_31 = arith.constant dense<0.000000e+00> : vector<16x32xf32>
    %36 = tpu.matmul %34, %35, %cst_31 {dimension_numbers = #tpu.dot_dimension_numbers<[1], [0], [0], [1], [0, 0, 1, 1], [], []>} : vector<16x64xf32>, vector<64x32xf32>, vector<16x32xf32> -> vector<16x32xf32>
    %c0_32 = arith.constant 0 : index
    %c0_33 = arith.constant 0 : index
    %37 = vector.load %arg13[%c0_32, %c0_33] : memref<1x32xf32, #tpu.memory_space<vmem>>, vector<1x32xf32>
    %38 = vector.broadcast %37 : vector<1x32xf32> to vector<16x32xf32>
    %39 = arith.addf %36, %38 : vector<16x32xf32>
    %cst_34 = arith.constant 0.000000e+00 : f32
    %40 = vector.broadcast %cst_34 : f32 to vector<16x32xf32>
    %41 = arith.maximumf %39, %40 : vector<16x32xf32>
    %c0_35 = arith.constant 0 : index
    %c0_36 = arith.constant 0 : index
    %42 = vector.load %arg14[%c0_35, %c0_36] : memref<32x16xf32, #tpu.memory_space<vmem>>, vector<32x16xf32>
    %cst_37 = arith.constant dense<0.000000e+00> : vector<16x16xf32>
    %43 = tpu.matmul %41, %42, %cst_37 {dimension_numbers = #tpu.dot_dimension_numbers<[1], [0], [0], [1], [0, 0, 1, 1], [], []>} : vector<16x32xf32>, vector<32x16xf32>, vector<16x16xf32> -> vector<16x16xf32>
    %c0_38 = arith.constant 0 : index
    %c0_39 = arith.constant 0 : index
    %44 = vector.load %arg15[%c0_38, %c0_39] : memref<1x16xf32, #tpu.memory_space<vmem>>, vector<1x16xf32>
    %45 = vector.broadcast %44 : vector<1x16xf32> to vector<16x16xf32>
    %46 = arith.addf %43, %45 : vector<16x16xf32>
    %c0_40 = arith.constant 0 : index
    %c0_41 = arith.constant 0 : index
    %47 = vector.load %arg16[%c0_40, %c0_41] : memref<16x16xf32, #tpu.memory_space<vmem>>, vector<16x16xf32>
    tpu.vector_store %arg16[%c0_40, %c0_41], %46 {strides = array<i32>} : memref<16x16xf32, #tpu.memory_space<vmem>>, vector<16x16xf32>,
    return
  }
  func.func @transform_0(%arg0: i32) -> (i32, i32) {
    %c0_i32 = arith.constant 0 : i32
    %c0_i32_0 = arith.constant 0 : i32
    return %arg0, %c0_i32 : i32, i32
  }
  func.func @transform_1(%arg0: i32) -> (i32, i32) {
    %c0_i32 = arith.constant 0 : i32
    %c0_i32_0 = arith.constant 0 : i32
    %c0_i32_1 = arith.constant 0 : i32
    return %c0_i32, %c0_i32_0 : i32, i32
  }
  func.func @transform_2(%arg0: i32) -> (i32, i32) {
    %c0_i32 = arith.constant 0 : i32
    %c0_i32_0 = arith.constant 0 : i32
    %c0_i32_1 = arith.constant 0 : i32
    return %c0_i32, %c0_i32_0 : i32, i32
  }
  func.func @transform_3(%arg0: i32) -> (i32, i32) {
    %c0_i32 = arith.constant 0 : i32
    %c0_i32_0 = arith.constant 0 : i32
    %c0_i32_1 = arith.constant 0 : i32
    return %c0_i32, %c0_i32_0 : i32, i32
  }
  func.func @transform_4(%arg0: i32) -> (i32, i32) {
    %c0_i32 = arith.constant 0 : i32
    %c0_i32_0 = arith.constant 0 : i32
    %c0_i32_1 = arith.constant 0 : i32
    return %c0_i32, %c0_i32_0 : i32, i32
  }
  func.func @transform_5(%arg0: i32) -> (i32, i32) {
    %c0_i32 = arith.constant 0 : i32
    %c0_i32_0 = arith.constant 0 : i32
    %c0_i32_1 = arith.constant 0 : i32
    return %c0_i32, %c0_i32_0 : i32, i32
  }
  func.func @transform_6(%arg0: i32) -> (i32, i32) {
    %c0_i32 = arith.constant 0 : i32
    %c0_i32_0 = arith.constant 0 : i32
    %c0_i32_1 = arith.constant 0 : i32
    return %c0_i32, %c0_i32_0 : i32, i32
  }
  func.func @transform_7(%arg0: i32) -> (i32, i32) {
    %c0_i32 = arith.constant 0 : i32
    %c0_i32_0 = arith.constant 0 : i32
    %c0_i32_1 = arith.constant 0 : i32
    return %c0_i32, %c0_i32_0 : i32, i32
  }
  func.func @transform_8(%arg0: i32) -> (i32, i32) {
    %c0_i32 = arith.constant 0 : i32
    %c0_i32_0 = arith.constant 0 : i32
    %c0_i32_1 = arith.constant 0 : i32
    return %c0_i32, %c0_i32_0 : i32, i32
  }
  func.func @transform_9(%arg0: i32) -> (i32, i32) {
    %c0_i32 = arith.constant 0 : i32
    %c0_i32_0 = arith.constant 0 : i32
    %c0_i32_1 = arith.constant 0 : i32
    return %c0_i32, %c0_i32_0 : i32, i32
  }
  func.func @transform_10(%arg0: i32) -> (i32, i32) {
    %c0_i32 = arith.constant 0 : i32
    %c0_i32_0 = arith.constant 0 : i32
    %c0_i32_1 = arith.constant 0 : i32
    return %c0_i32, %c0_i32_0 : i32, i32
  }
  func.func @transform_11(%arg0: i32) -> (i32, i32) {
    %c0_i32 = arith.constant 0 : i32
    %c0_i32_0 = arith.constant 0 : i32
    %c0_i32_1 = arith.constant 0 : i32
    return %c0_i32, %c0_i32_0 : i32, i32
  }
  func.func @transform_12(%arg0: i32) -> (i32, i32) {
    %c0_i32 = arith.constant 0 : i32
    %c0_i32_0 = arith.constant 0 : i32
    %c0_i32_1 = arith.constant 0 : i32
    return %c0_i32, %c0_i32_0 : i32, i32
  }
  func.func @transform_13(%arg0: i32) -> (i32, i32) {
    %c0_i32 = arith.constant 0 : i32
    %c0_i32_0 = arith.constant 0 : i32
    %c0_i32_1 = arith.constant 0 : i32
    return %c0_i32, %c0_i32_0 : i32, i32
  }
  func.func @transform_14(%arg0: i32) -> (i32, i32) {
    %c0_i32 = arith.constant 0 : i32
    %c0_i32_0 = arith.constant 0 : i32
    %c0_i32_1 = arith.constant 0 : i32
    return %c0_i32, %c0_i32_0 : i32, i32
  }
  func.func @transform_15(%arg0: i32) -> (i32, i32) {
    %c0_i32 = arith.constant 0 : i32
    %c0_i32_0 = arith.constant 0 : i32
    return %arg0, %c0_i32 : i32, i32
  }
}

</mosaic_0001>

<llo_original>
// kernel: tpu_custom_call.1
$region0: #{tpu_custom_call.1}
  #allocation0 [shape = 'u32[]', space=smem, size = 0x4, offset = 0x4, fixed_abs, tag = 'smem constant byte address 0x4 - core index']
  #allocation1 [shape = 'u32[144,128]{1,0:T(1,128)}', space=vmem, size = 0x12000, scoped, tag = 'internal scratch']
  %s0 = inlined_call_operand.vmem [shape: f32[16,16], index: 0, kind: input, shape index: {}]
  %s1 = inlined_call_operand.vmem [shape: f32[16,128], index: 1, kind: input, shape index: {}]
  %s2 = inlined_call_operand.vmem [shape: f32[1,128], index: 2, kind: input, shape index: {}]
  %s3 = inlined_call_operand.vmem [shape: f32[128,64], index: 3, kind: input, shape index: {}]
  %s4 = inlined_call_operand.vmem [shape: f32[1,64], index: 4, kind: input, shape index: {}]
  %s5 = inlined_call_operand.vmem [shape: f32[64,16], index: 5, kind: input, shape index: {}]
  %s6 = inlined_call_operand.vmem [shape: f32[1,16], index: 6, kind: input, shape index: {}]
  %s7 = inlined_call_operand.vmem [shape: f32[16,128], index: 7, kind: input, shape index: {}]
  %s8 = inlined_call_operand.vmem [shape: f32[1,128], index: 8, kind: input, shape index: {}]
  %s9 = inlined_call_operand.vmem [shape: f32[128,64], index: 9, kind: input, shape index: {}]
  %s10 = inlined_call_operand.vmem [shape: f32[1,64], index: 10, kind: input, shape index: {}]
  %s11 = inlined_call_operand.vmem [shape: f32[64,32], index: 11, kind: input, shape index: {}]
  %s12 = inlined_call_operand.vmem [shape: f32[1,32], index: 12, kind: input, shape index: {}]
  %s13 = inlined_call_operand.vmem [shape: f32[32,16], index: 13, kind: input, shape index: {}]
  %s14 = inlined_call_operand.vmem [shape: f32[1,16], index: 14, kind: input, shape index: {}]
  %s15 = inlined_call_operand.hbm [shape: f32[16,16], index: 15, kind: output, shape index: {}]
  %s16 = sld [smem:[#allocation0]]
  $region70: #{tpu_custom_call.1} parent=0
    _
  %s18 = ssub.s32 1, %s16
  %s19 = scalar_select 0, %s18, %s16
  $region1: #{tpu_custom_call.1} parent=0
    #allocation2 [shape = 'u8[8192]{0}', space=vmem, size = 0x2000, scoped, tag = 'output window, operand 0, single buffered']
    #allocation3 [shape = 's32[1]{0}', space=sflag, size = 0x4, scoped, tag = 'scoped memory for tpu_custom_call.1']
    %20 = vsyncpa [#allocation3], 0
    // Predicated region
    $region2: #{tpu_custom_call.1} parent=1 // pred_check
      _
    $region3: #{tpu_custom_call.1} parent=1 // pred_check_branch
      %22 = sbr.rel (0) target = $region5
    $region4: #{tpu_custom_call.1} parent=1 // pred_region
      _
    $region5: #{tpu_custom_call.1} parent=1 // pred_fallthru
      _
    // Predicated region
    $region6: #{tpu_custom_call.1} parent=1 // pred_check
      _
    $region7: #{tpu_custom_call.1} parent=1 // pred_check_branch
      %24 = sbr.rel (0) target = $region9
    $region8: #{tpu_custom_call.1} parent=1 // pred_region
      _
    $region9: #{tpu_custom_call.1} parent=1 // pred_fallthru
      _
    // Predicated region
    $region10: #{tpu_custom_call.1} parent=1 // pred_check
      _
    $region11: #{tpu_custom_call.1} parent=1 // pred_check_branch
      %26 = sbr.rel (0) target = $region13
    $region12: #{tpu_custom_call.1} parent=1 // pred_region
      _
    $region13: #{tpu_custom_call.1} parent=1 // pred_fallthru
      _
    // Predicated region
    $region14: #{tpu_custom_call.1} parent=1 // pred_check
      _
    $region15: #{tpu_custom_call.1} parent=1 // pred_check_branch
      %28 = sbr.rel (0) target = $region17
    $region16: #{tpu_custom_call.1} parent=1 // pred_region
      _
    $region17: #{tpu_custom_call.1} parent=1 // pred_fallthru
      _
    // Predicated region
    $region18: #{tpu_custom_call.1} parent=1 // pred_check
      _
    $region19: #{tpu_custom_call.1} parent=1 // pred_check_branch
      %30 = sbr.rel (0) target = $region21
    $region20: #{tpu_custom_call.1} parent=1 // pred_region
      _
    $region21: #{tpu_custom_call.1} parent=1 // pred_fallthru
      _
    // Predicated region
    $region22: #{tpu_custom_call.1} parent=1 // pred_check
      _
    $region23: #{tpu_custom_call.1} parent=1 // pred_check_branch
      %32 = sbr.rel (0) target = $region25
    $region24: #{tpu_custom_call.1} parent=1 // pred_region
      _
    $region25: #{tpu_custom_call.1} parent=1 // pred_fallthru
      _
    // Predicated region
    $region26: #{tpu_custom_call.1} parent=1 // pred_check
      _
    $region27: #{tpu_custom_call.1} parent=1 // pred_check_branch
      %34 = sbr.rel (0) target = $region29
    $region28: #{tpu_custom_call.1} parent=1 // pred_region
      _
    $region29: #{tpu_custom_call.1} parent=1 // pred_fallthru
      _
    // Predicated region
    $region30: #{tpu_custom_call.1} parent=1 // pred_check
      _
    $region31: #{tpu_custom_call.1} parent=1 // pred_check_branch
      %36 = sbr.rel (0) target = $region33
    $region32: #{tpu_custom_call.1} parent=1 // pred_region
      _
    $region33: #{tpu_custom_call.1} parent=1 // pred_fallthru
      _
    // Predicated region
    $region34: #{tpu_custom_call.1} parent=1 // pred_check
      _
    $region35: #{tpu_custom_call.1} parent=1 // pred_check_branch
      %38 = sbr.rel (0) target = $region37
    $region36: #{tpu_custom_call.1} parent=1 // pred_region
      _
    $region37: #{tpu_custom_call.1} parent=1 // pred_fallthru
      _
    // Predicated region
    $region38: #{tpu_custom_call.1} parent=1 // pred_check
      _
    $region39: #{tpu_custom_call.1} parent=1 // pred_check_branch
      %40 = sbr.rel (0) target = $region41
    $region40: #{tpu_custom_call.1} parent=1 // pred_region
      _
    $region41: #{tpu_custom_call.1} parent=1 // pred_fallthru
      _
    // Predicated region
    $region42: #{tpu_custom_call.1} parent=1 // pred_check
      _
    $region43: #{tpu_custom_call.1} parent=1 // pred_check_branch
      %42 = sbr.rel (0) target = $region45
    $region44: #{tpu_custom_call.1} parent=1 // pred_region
      _
    $region45: #{tpu_custom_call.1} parent=1 // pred_fallthru
      _
    // Predicated region
    $region46: #{tpu_custom_call.1} parent=1 // pred_check
      _
    $region47: #{tpu_custom_call.1} parent=1 // pred_check_branch
      %44 = sbr.rel (0) target = $region49
    $region48: #{tpu_custom_call.1} parent=1 // pred_region
      _
    $region49: #{tpu_custom_call.1} parent=1 // pred_fallthru
      _
    // Predicated region
    $region50: #{tpu_custom_call.1} parent=1 // pred_check
      _
    $region51: #{tpu_custom_call.1} parent=1 // pred_check_branch
      %46 = sbr.rel (0) target = $region53
    $region52: #{tpu_custom_call.1} parent=1 // pred_region
      _
    $region53: #{tpu_custom_call.1} parent=1 // pred_fallthru
      _
    // Predicated region
    $region54: #{tpu_custom_call.1} parent=1 // pred_check
      _
    $region55: #{tpu_custom_call.1} parent=1 // pred_check_branch
      %48 = sbr.rel (0) target = $region57
    $region56: #{tpu_custom_call.1} parent=1 // pred_region
      _
    $region57: #{tpu_custom_call.1} parent=1 // pred_fallthru
      _
    // Predicated region
    $region58: #{tpu_custom_call.1} parent=1 // pred_check
      _
    $region59: #{tpu_custom_call.1} parent=1 // pred_check_branch
      %50 = sbr.rel (0) target = $region61
    $region60: #{tpu_custom_call.1} parent=1 // pred_region
      _
    $region61: #{tpu_custom_call.1} parent=1 // pred_fallthru
      _
    %v51 = vld [vmem:[%s0] sm:$0xff]
    %v52 = vld [vmem:[%s0 + $0x8] sm:$0xff]
    %v53 = vld [vmem:[%s1] sm:$0xff]
    %v54 = vld [vmem:[%s1 + $0x8] sm:$0xff]
    %v55 = vld [vmem:[%s2] sm:$0x1]
    %v57 = vlaneseq
    %v58 = vshrl.u32 %v57, 7
    %v59 = vsub.s32 0, %v58
    %v60 = vrot.slane %v55, %v59
    %vm62 = vcmask 130048
    %v64 = vsel %vm62, %v51, 0
    %v67 = vsel %vm62, %v52, 0
    %69 = vmatprep.subr.mxu0 0.0
    %70 = vmatpush1.msra.mxu0 %v53
    %71 = vmatprep.subr.mxu0 0.0
    %72 = vmatpush1.msra.mxu0 %v54
    %73 = vmatprep.subr.mxu0 0.0
    %74 = vmatpush1.msra.mxu0 0.0
    %75 = vmatprep.subr.mxu0 0.0
    %76 = vmatpush1.msra.mxu0 0.0
    %77 = vmatprep.subr.mxu0 0.0
    %78 = vmatpush1.msra.mxu0 0.0
    %79 = vmatprep.subr.mxu0 0.0
    %80 = vmatpush1.msra.mxu0 0.0
    %81 = vmatprep.subr.mxu0 0.0
    %82 = vmatpush1.msra.mxu0 0.0
    %83 = vmatprep.subr.mxu0 0.0
    %84 = vmatpush1.msra.mxu0 0.0
    %85 = vmatprep.subr.mxu0 0.0
    %86 = vmatpush1.msra.mxu0 0.0
    %87 = vmatprep.subr.mxu0 0.0
    %88 = vmatpush1.msra.mxu0 0.0
    %89 = vmatprep.subr.mxu0 0.0
    %90 = vmatpush1.msra.mxu0 0.0
    %91 = vmatprep.subr.mxu0 0.0
    %92 = vmatpush1.msra.mxu0 0.0
    %93 = vmatprep.subr.mxu0 0.0
    %94 = vmatpush1.msra.mxu0 0.0
    %95 = vmatprep.subr.mxu0 0.0
    %96 = vmatpush1.msra.mxu0 0.0
    %97 = vmatprep.subr.mxu0 0.0
    %98 = vmatpush1.msra.mxu0 0.0
    %99 = vmatprep.subr.mxu0 0.0
    %100 = vmatpush1.msra.mxu0 0.0
    %101 = vmatprep.subr.mxu0 0.0
    %102 = vmatpush1.msra.mxu0 0.0
    %103 = vmatprep.subr.mxu0 0.0
    %104 = vmatpush1.msra.mxu0 0.0
    %105 = vmatprep.subr.mxu0 0.0
    %106 = vmatpush1.msra.mxu0 0.0
    %107 = vmatprep.subr.mxu0 0.0
    %108 = vmatpush1.msra.mxu0 0.0
    %109 = vmatprep.subr.mxu0 0.0
    %110 = vmatpush1.msra.mxu0 0.0
    %111 = vmatprep.subr.mxu0 0.0
    %112 = vmatpush1.msra.mxu0 0.0
    %113 = vmatprep.subr.mxu0 0.0
    %114 = vmatpush1.msra.mxu0 0.0
    %115 = vmatprep.subr.mxu0 0.0
    %116 = vmatpush1.msra.mxu0 0.0
    %117 = vmatprep.subr.mxu0 0.0
    %118 = vmatpush1.msra.mxu0 0.0
    %119 = vmatprep.subr.mxu0 0.0
    %120 = vmatpush1.msra.mxu0 0.0
    %121 = vmatprep.subr.mxu0 0.0
    %122 = vmatpush1.msra.mxu0 0.0
    %123 = vmatprep.subr.mxu0 0.0
    %124 = vmatpush1.msra.mxu0 0.0
    %125 = vmatprep.subr.mxu0 0.0
    %126 = vmatpush1.msra.mxu0 0.0
    %127 = vmatprep.subr.mxu0 0.0
    %128 = vmatpush1.msra.mxu0 0.0
    %129 = vmatprep.subr.mxu0 0.0
    %130 = vmatpush1.msra.mxu0 0.0
    %131 = vmatprep.subr.mxu0 0.0
    %132 = vmatpush1.msra.mxu0 0.0
    %133 = vmatprep.mubr.f32.mxu0 0.0
    %134 = vmatmul.mubr.f32.gmra.mrb[0].mxu0 %v64
    %v135 = vpop.f32.mrb[0].mxu0
    %v136 = vadd.f32 %v60, %v135
    %v137 = vpop.f32.mrb[0].mxu0
    %138 = vmatprep.mubr.f32.mxu0 0.0
    %139 = vmatmul.mubr.f32.gmra.mrb[0].mxu0 %v67
    %v140 = vpop.f32.mrb[0].mxu0
    %v141 = vadd.f32 %v60, %v140
    %v142 = vpop.f32.mrb[0].mxu0
    %143 = vdwg.mxu0
    %v144 = vmax.f32 %v136, 0.0
    %v145 = vmax.f32 %v141, 0.0
    %v146 = vld [vmem:[%s3] sm:$0xff]
    %v147 = vld [vmem:[%s3 + $0x8] sm:$0xff]
    %v148 = vld [vmem:[%s3 + $0x10] sm:$0xff]
    %v149 = vld [vmem:[%s3 + $0x18] sm:$0xff]
    %v150 = vld [vmem:[%s3 + $0x20] sm:$0xff]
    %v151 = vld [vmem:[%s3 + $0x28] sm:$0xff]
    %v152 = vld [vmem:[%s3 + $0x30] sm:$0xff]
    %v153 = vld [vmem:[%s3 + $0x38] sm:$0xff]
    %v154 = vld [vmem:[%s3 + $0x40] sm:$0xff]
    %v155 = vld [vmem:[%s3 + $0x48] sm:$0xff]
    %v156 = vld [vmem:[%s3 + $0x50] sm:$0xff]
    %v157 = vld [vmem:[%s3 + $0x58] sm:$0xff]
    %v158 = vld [vmem:[%s3 + $0x60] sm:$0xff]
    %v159 = vld [vmem:[%s3 + $0x68] sm:$0xff]
    %v160 = vld [vmem:[%s3 + $0x70] sm:$0xff]
    %v161 = vld [vmem:[%s3 + $0x78] sm:$0xff]
    %v162 = vld [vmem:[%s4] sm:$0x1]
    %v164 = vlaneseq
    %v165 = vshrl.u32 %v164, 7
    %v166 = vsub.s32 0, %v165
    %v167 = vrot.slane %v162, %v166
    %169 = vmatprep.subr.mxu0 0.0
    %170 = vmatpush1.msra.mxu0 %v146
    %171 = vmatprep.subr.mxu0 0.0
    %172 = vmatpush1.msra.mxu0 %v147
    %173 = vmatprep.subr.mxu0 0.0
    %174 = vmatpush1.msra.mxu0 %v148
    %175 = vmatprep.subr.mxu0 0.0
    %176 = vmatpush1.msra.mxu0 %v149
    %177 = vmatprep.subr.mxu0 0.0
    %178 = vmatpush1.msra.mxu0 %v150
    %179 = vmatprep.subr.mxu0 0.0
    %180 = vmatpush1.msra.mxu0 %v151
    %181 = vmatprep.subr.mxu0 0.0
    %182 = vmatpush1.msra.mxu0 %v152
    %183 = vmatprep.subr.mxu0 0.0
    %184 = vmatpush1.msra.mxu0 %v153
    %185 = vmatprep.subr.mxu0 0.0
    %186 = vmatpush1.msra.mxu0 %v154
    %187 = vmatprep.subr.mxu0 0.0
    %188 = vmatpush1.msra.mxu0 %v155
    %189 = vmatprep.subr.mxu0 0.0
    %190 = vmatpush1.msra.mxu0 %v156
    %191 = vmatprep.subr.mxu0 0.0
    %192 = vmatpush1.msra.mxu0 %v157
    %193 = vmatprep.subr.mxu0 0.0
    %194 = vmatpush1.msra.mxu0 %v158
    %195 = vmatprep.subr.mxu0 0.0
    %196 = vmatpush1.msra.mxu0 %v159
    %197 = vmatprep.subr.mxu0 0.0
    %198 = vmatpush1.msra.mxu0 %v160
    %199 = vmatprep.subr.mxu0 0.0
    %200 = vmatpush1.msra.mxu0 %v161
    %201 = vmatprep.subr.mxu0 0.0
    %202 = vmatpush1.msra.mxu0 0.0
    %203 = vmatprep.subr.mxu0 0.0
    %204 = vmatpush1.msra.mxu0 0.0
    %205 = vmatprep.subr.mxu0 0.0
    %206 = vmatpush1.msra.mxu0 0.0
    %207 = vmatprep.subr.mxu0 0.0
    %208 = vmatpush1.msra.mxu0 0.0
    %209 = vmatprep.subr.mxu0 0.0
    %210 = vmatpush1.msra.mxu0 0.0
    %211 = vmatprep.subr.mxu0 0.0
    %212 = vmatpush1.msra.mxu0 0.0
    %213 = vmatprep.subr.mxu0 0.0
    %214 = vmatpush1.msra.mxu0 0.0
    %215 = vmatprep.subr.mxu0 0.0
    %216 = vmatpush1.msra.mxu0 0.0
    %217 = vmatprep.subr.mxu0 0.0
    %218 = vmatpush1.msra.mxu0 0.0
    %219 = vmatprep.subr.mxu0 0.0
    %220 = vmatpush1.msra.mxu0 0.0
    %221 = vmatprep.subr.mxu0 0.0
    %222 = vmatpush1.msra.mxu0 0.0
    %223 = vmatprep.subr.mxu0 0.0
    %224 = vmatpush1.msra.mxu0 0.0
    %225 = vmatprep.subr.mxu0 0.0
    %226 = vmatpush1.msra.mxu0 0.0
    %227 = vmatprep.subr.mxu0 0.0
    %228 = vmatpush1.msra.mxu0 0.0
    %229 = vmatprep.subr.mxu0 0.0
    %230 = vmatpush1.msra.mxu0 0.0
    %231 = vmatprep.subr.mxu0 0.0
    %232 = vmatpush1.msra.mxu0 0.0
    %233 = vmatprep.mubr.f32.mxu0 0.0
    %234 = vmatmul.mubr.f32.gmra.mrb[0].mxu0 %v144
    %v235 = vpop.f32.mrb[0].mxu0
    %v236 = vadd.f32 %v167, %v235
    %v237 = vpop.f32.mrb[0].mxu0
    %238 = vmatprep.mubr.f32.mxu0 0.0
    %239 = vmatmul.mubr.f32.gmra.mrb[0].mxu0 %v145
    %v240 = vpop.f32.mrb[0].mxu0
    %v241 = vadd.f32 %v167, %v240
    %v242 = vpop.f32.mrb[0].mxu0
    %243 = vdwg.mxu0
    %v244 = vmax.f32 %v236, 0.0
    %v245 = vmax.f32 %v241, 0.0
    %v246 = vld [vmem:[%s5] sm:$0xff]
    %v247 = vld [vmem:[%s5 + $0x8] sm:$0xff]
    %v248 = vld [vmem:[%s5 + $0x10] sm:$0xff]
    %v249 = vld [vmem:[%s5 + $0x18] sm:$0xff]
    %v250 = vld [vmem:[%s5 + $0x20] sm:$0xff]
    %v251 = vld [vmem:[%s5 + $0x28] sm:$0xff]
    %v252 = vld [vmem:[%s5 + $0x30] sm:$0xff]
    %v253 = vld [vmem:[%s5 + $0x38] sm:$0xff]
    %v254 = vld [vmem:[%s6] sm:$0x1]
    %v256 = vlaneseq
    %v257 = vshrl.u32 %v256, 7
    %v258 = vsub.s32 0, %v257
    %v259 = vrot.slane %v254, %v258
    %vm261 = vcmask 523264
    %v263 = vsel %vm261, %v244, 0
    %v266 = vsel %vm261, %v245, 0
    %268 = vmatprep.subr.mxu0 0.0
    %269 = vmatpush1.msra.mxu0 %v246
    %270 = vmatprep.subr.mxu0 0.0
    %271 = vmatpush1.msra.mxu0 %v247
    %272 = vmatprep.subr.mxu0 0.0
    %273 = vmatpush1.msra.mxu0 %v248
    %274 = vmatprep.subr.mxu0 0.0
    %275 = vmatpush1.msra.mxu0 %v249
    %276 = vmatprep.subr.mxu0 0.0
    %277 = vmatpush1.msra.mxu0 %v250
    %278 = vmatprep.subr.mxu0 0.0
    %279 = vmatpush1.msra.mxu0 %v251
    %280 = vmatprep.subr.mxu0 0.0
    %281 = vmatpush1.msra.mxu0 %v252
    %282 = vmatprep.subr.mxu0 0.0
    %283 = vmatpush1.msra.mxu0 %v253
    %284 = vmatprep.subr.mxu0 0.0
    %285 = vmatpush1.msra.mxu0 0.0
    %286 = vmatprep.subr.mxu0 0.0
    %287 = vmatpush1.msra.mxu0 0.0
    %288 = vmatprep.subr.mxu0 0.0
    %289 = vmatpush1.msra.mxu0 0.0
    %290 = vmatprep.subr.mxu0 0.0
    %291 = vmatpush1.msra.mxu0 0.0
    %292 = vmatprep.subr.mxu0 0.0
    %293 = vmatpush1.msra.mxu0 0.0
    %294 = vmatprep.subr.mxu0 0.0
    %295 = vmatpush1.msra.mxu0 0.0
    %296 = vmatprep.subr.mxu0 0.0
    %297 = vmatpush1.msra.mxu0 0.0
    %298 = vmatprep.subr.mxu0 0.0
    %299 = vmatpush1.msra.mxu0 0.0
    %300 = vmatprep.subr.mxu0 0.0
    %301 = vmatpush1.msra.mxu0 0.0
    %302 = vmatprep.subr.mxu0 0.0
    %303 = vmatpush1.msra.mxu0 0.0
    %304 = vmatprep.subr.mxu0 0.0
    %305 = vmatpush1.msra.mxu0 0.0
    %306 = vmatprep.subr.mxu0 0.0
    %307 = vmatpush1.msra.mxu0 0.0
    %308 = vmatprep.subr.mxu0 0.0
    %309 = vmatpush1.msra.mxu0 0.0
    %310 = vmatprep.subr.mxu0 0.0
    %311 = vmatpush1.msra.mxu0 0.0
    %312 = vmatprep.subr.mxu0 0.0
    %313 = vmatpush1.msra.mxu0 0.0
    %314 = vmatprep.subr.mxu0 0.0
    %315 = vmatpush1.msra.mxu0 0.0
    %316 = vmatprep.subr.mxu0 0.0
    %317 = vmatpush1.msra.mxu0 0.0
    %318 = vmatprep.subr.mxu0 0.0
    %319 = vmatpush1.msra.mxu0 0.0
    %320 = vmatprep.subr.mxu0 0.0
    %321 = vmatpush1.msra.mxu0 0.0
    %322 = vmatprep.subr.mxu0 0.0
    %323 = vmatpush1.msra.mxu0 0.0
    %324 = vmatprep.subr.mxu0 0.0
    %325 = vmatpush1.msra.mxu0 0.0
    %326 = vmatprep.subr.mxu0 0.0
    %327 = vmatpush1.msra.mxu0 0.0
    %328 = vmatprep.subr.mxu0 0.0
    %329 = vmatpush1.msra.mxu0 0.0
    %330 = vmatprep.subr.mxu0 0.0
    %331 = vmatpush1.msra.mxu0 0.0
    %332 = vmatprep.mubr.f32.mxu0 0.0
    %333 = vmatmul.mubr.f32.gmra.mrb[0].mxu0 %v263
    %v334 = vpop.f32.mrb[0].mxu0
    %v335 = vadd.f32 %v259, %v334
    %v336 = vpop.f32.mrb[0].mxu0
    %337 = vmatprep.mubr.f32.mxu0 0.0
    %338 = vmatmul.mubr.f32.gmra.mrb[0].mxu0 %v266
    %v339 = vpop.f32.mrb[0].mxu0
    %v340 = vadd.f32 %v259, %v339
    %v341 = vpop.f32.mrb[0].mxu0
    %342 = vdwg.mxu0
    %v343 = vmul.f32 %v335, %v51
    %v344 = vmul.f32 %v340, %v52
    %v345 = vld [vmem:[%s7] sm:$0xff]
    %v346 = vld [vmem:[%s7 + $0x8] sm:$0xff]
    %v347 = vld [vmem:[%s8] sm:$0x1]
    %v349 = vlaneseq
    %v350 = vshrl.u32 %v349, 7
    %v351 = vsub.s32 0, %v350
    %v352 = vrot.slane %v347, %v351
    %v355 = vsel %vm62, %v343, 0
    %v358 = vsel %vm62, %v344, 0
    %360 = vmatprep.subr.mxu0 0.0
    %361 = vmatpush1.msra.mxu0 %v345
    %362 = vmatprep.subr.mxu0 0.0
    %363 = vmatpush1.msra.mxu0 %v346
    %364 = vmatprep.subr.mxu0 0.0
    %365 = vmatpush1.msra.mxu0 0.0
    %366 = vmatprep.subr.mxu0 0.0
    %367 = vmatpush1.msra.mxu0 0.0
    %368 = vmatprep.subr.mxu0 0.0
    %369 = vmatpush1.msra.mxu0 0.0
    %370 = vmatprep.subr.mxu0 0.0
    %371 = vmatpush1.msra.mxu0 0.0
    %372 = vmatprep.subr.mxu0 0.0
    %373 = vmatpush1.msra.mxu0 0.0
    %374 = vmatprep.subr.mxu0 0.0
    %375 = vmatpush1.msra.mxu0 0.0
    %376 = vmatprep.subr.mxu0 0.0
    %377 = vmatpush1.msra.mxu0 0.0
    %378 = vmatprep.subr.mxu0 0.0
    %379 = vmatpush1.msra.mxu0 0.0
    %380 = vmatprep.subr.mxu0 0.0
    %381 = vmatpush1.msra.mxu0 0.0
    %382 = vmatprep.subr.mxu0 0.0
    %383 = vmatpush1.msra.mxu0 0.0
    %384 = vmatprep.subr.mxu0 0.0
    %385 = vmatpush1.msra.mxu0 0.0
    %386 = vmatprep.subr.mxu0 0.0
    %387 = vmatpush1.msra.mxu0 0.0
    %388 = vmatprep.subr.mxu0 0.0
    %389 = vmatpush1.msra.mxu0 0.0
    %390 = vmatprep.subr.mxu0 0.0
    %391 = vmatpush1.msra.mxu0 0.0
    %392 = vmatprep.subr.mxu0 0.0
    %393 = vmatpush1.msra.mxu0 0.0
    %394 = vmatprep.subr.mxu0 0.0
    %395 = vmatpush1.msra.mxu0 0.0
    %396 = vmatprep.subr.mxu0 0.0
    %397 = vmatpush1.msra.mxu0 0.0
    %398 = vmatprep.subr.mxu0 0.0
    %399 = vmatpush1.msra.mxu0 0.0
    %400 = vmatprep.subr.mxu0 0.0
    %401 = vmatpush1.msra.mxu0 0.0
    %402 = vmatprep.subr.mxu0 0.0
    %403 = vmatpush1.msra.mxu0 0.0
    %404 = vmatprep.subr.mxu0 0.0
    %405 = vmatpush1.msra.mxu0 0.0
    %406 = vmatprep.subr.mxu0 0.0
    %407 = vmatpush1.msra.mxu0 0.0
    %408 = vmatprep.subr.mxu0 0.0
    %409 = vmatpush1.msra.mxu0 0.0
    %410 = vmatprep.subr.mxu0 0.0
    %411 = vmatpush1.msra.mxu0 0.0
    %412 = vmatprep.subr.mxu0 0.0
    %413 = vmatpush1.msra.mxu0 0.0
    %414 = vmatprep.subr.mxu0 0.0
    %415 = vmatpush1.msra.mxu0 0.0
    %416 = vmatprep.subr.mxu0 0.0
    %417 = vmatpush1.msra.mxu0 0.0
    %418 = vmatprep.subr.mxu0 0.0
    %419 = vmatpush1.msra.mxu0 0.0
    %420 = vmatprep.subr.mxu0 0.0
    %421 = vmatpush1.msra.mxu0 0.0
    %422 = vmatprep.subr.mxu0 0.0
    %423 = vmatpush1.msra.mxu0 0.0
    %424 = vmatprep.mubr.f32.mxu0 0.0
    %425 = vmatmul.mubr.f32.gmra.mrb[0].mxu0 %v355
    %v426 = vpop.f32.mrb[0].mxu0
    %v427 = vadd.f32 %v352, %v426
    %v428 = vpop.f32.mrb[0].mxu0
    %429 = vmatprep.mubr.f32.mxu0 0.0
    %430 = vmatmul.mubr.f32.gmra.mrb[0].mxu0 %v358
    %v431 = vpop.f32.mrb[0].mxu0
    %v432 = vadd.f32 %v352, %v431
    %v433 = vpop.f32.mrb[0].mxu0
    %434 = vdwg.mxu0
    %v435 = vmax.f32 %v427, 0.0
    %v436 = vmax.f32 %v432, 0.0
    %v437 = vld [vmem:[%s9] sm:$0xff]
    %v438 = vld [vmem:[%s9 + $0x8] sm:$0xff]
    %v439 = vld [vmem:[%s9 + $0x10] sm:$0xff]
    %v440 = vld [vmem:[%s9 + $0x18] sm:$0xff]
    %v441 = vld [vmem:[%s9 + $0x20] sm:$0xff]
    %v442 = vld [vmem:[%s9 + $0x28] sm:$0xff]
    %v443 = vld [vmem:[%s9 + $0x30] sm:$0xff]
    %v444 = vld [vmem:[%s9 + $0x38] sm:$0xff]
    %v445 = vld [vmem:[%s9 + $0x40] sm:$0xff]
    %v446 = vld [vmem:[%s9 + $0x48] sm:$0xff]
    %v447 = vld [vmem:[%s9 + $0x50] sm:$0xff]
    %v448 = vld [vmem:[%s9 + $0x58] sm:$0xff]
    %v449 = vld [vmem:[%s9 + $0x60] sm:$0xff]
    %v450 = vld [vmem:[%s9 + $0x68] sm:$0xff]
    %v451 = vld [vmem:[%s9 + $0x70] sm:$0xff]
    %v452 = vld [vmem:[%s9 + $0x78] sm:$0xff]
    %v453 = vld [vmem:[%s10] sm:$0x1]
    %v455 = vlaneseq
    %v456 = vshrl.u32 %v455, 7
    %v457 = vsub.s32 0, %v456
    %v458 = vrot.slane %v453, %v457
    %460 = vmatprep.subr.mxu0 0.0
    %461 = vmatpush1.msra.mxu0 %v437
    %462 = vmatprep.subr.mxu0 0.0
    %463 = vmatpush1.msra.mxu0 %v438
    %464 = vmatprep.subr.mxu0 0.0
    %465 = vmatpush1.msra.mxu0 %v439
    %466 = vmatprep.subr.mxu0 0.0
    %467 = vmatpush1.msra.mxu0 %v440
    %468 = vmatprep.subr.mxu0 0.0
    %469 = vmatpush1.msra.mxu0 %v441
    %470 = vmatprep.subr.mxu0 0.0
    %471 = vmatpush1.msra.mxu0 %v442
    %472 = vmatprep.subr.mxu0 0.0
    %473 = vmatpush1.msra.mxu0 %v443
    %474 = vmatprep.subr.mxu0 0.0
    %475 = vmatpush1.msra.mxu0 %v444
    %476 = vmatprep.subr.mxu0 0.0
    %477 = vmatpush1.msra.mxu0 %v445
    %478 = vmatprep.subr.mxu0 0.0
    %479 = vmatpush1.msra.mxu0 %v446
    %480 = vmatprep.subr.mxu0 0.0
    %481 = vmatpush1.msra.mxu0 %v447
    %482 = vmatprep.subr.mxu0 0.0
    %483 = vmatpush1.msra.mxu0 %v448
    %484 = vmatprep.subr.mxu0 0.0
    %485 = vmatpush1.msra.mxu0 %v449
    %486 = vmatprep.subr.mxu0 0.0
    %487 = vmatpush1.msra.mxu0 %v450
    %488 = vmatprep.subr.mxu0 0.0
    %489 = vmatpush1.msra.mxu0 %v451
    %490 = vmatprep.subr.mxu0 0.0
    %491 = vmatpush1.msra.mxu0 %v452
    %492 = vmatprep.subr.mxu0 0.0
    %493 = vmatpush1.msra.mxu0 0.0
    %494 = vmatprep.subr.mxu0 0.0
    %495 = vmatpush1.msra.mxu0 0.0
    %496 = vmatprep.subr.mxu0 0.0
    %497 = vmatpush1.msra.mxu0 0.0
    %498 = vmatprep.subr.mxu0 0.0
    %499 = vmatpush1.msra.mxu0 0.0
    %500 = vmatprep.subr.mxu0 0.0
    %501 = vmatpush1.msra.mxu0 0.0
    %502 = vmatprep.subr.mxu0 0.0
    %503 = vmatpush1.msra.mxu0 0.0
    %504 = vmatprep.subr.mxu0 0.0
    %505 = vmatpush1.msra.mxu0 0.0
    %506 = vmatprep.subr.mxu0 0.0
    %507 = vmatpush1.msra.mxu0 0.0
    %508 = vmatprep.subr.mxu0 0.0
    %509 = vmatpush1.msra.mxu0 0.0
    %510 = vmatprep.subr.mxu0 0.0
    %511 = vmatpush1.msra.mxu0 0.0
    %512 = vmatprep.subr.mxu0 0.0
    %513 = vmatpush1.msra.mxu0 0.0
    %514 = vmatprep.subr.mxu0 0.0
    %515 = vmatpush1.msra.mxu0 0.0
    %516 = vmatprep.subr.mxu0 0.0
    %517 = vmatpush1.msra.mxu0 0.0
    %518 = vmatprep.subr.mxu0 0.0
    %519 = vmatpush1.msra.mxu0 0.0
    %520 = vmatprep.subr.mxu0 0.0
    %521 = vmatpush1.msra.mxu0 0.0
    %522 = vmatprep.subr.mxu0 0.0
    %523 = vmatpush1.msra.mxu0 0.0
    %524 = vmatprep.mubr.f32.mxu0 0.0
    %525 = vmatmul.mubr.f32.gmra.mrb[0].mxu0 %v435
    %v526 = vpop.f32.mrb[0].mxu0
    %v527 = vadd.f32 %v458, %v526
    %v528 = vpop.f32.mrb[0].mxu0
    %529 = vmatprep.mubr.f32.mxu0 0.0
    %530 = vmatmul.mubr.f32.gmra.mrb[0].mxu0 %v436
    %v531 = vpop.f32.mrb[0].mxu0
    %v532 = vadd.f32 %v458, %v531
    %v533 = vpop.f32.mrb[0].mxu0
    %534 = vdwg.mxu0
    %v535 = vmax.f32 %v527, 0.0
    %v536 = vmax.f32 %v532, 0.0
    %v537 = vld [vmem:[%s11] sm:$0xff]
    %v538 = vld [vmem:[%s11 + $0x8] sm:$0xff]
    %v539 = vld [vmem:[%s11 + $0x10] sm:$0xff]
    %v540 = vld [vmem:[%s11 + $0x18] sm:$0xff]
    %v541 = vld [vmem:[%s11 + $0x20] sm:$0xff]
    %v542 = vld [vmem:[%s11 + $0x28] sm:$0xff]
    %v543 = vld [vmem:[%s11 + $0x30] sm:$0xff]
    %v544 = vld [vmem:[%s11 + $0x38] sm:$0xff]
    %v545 = vld [vmem:[%s12] sm:$0x1]
    %v547 = vlaneseq
    %v548 = vshrl.u32 %v547, 7
    %v549 = vsub.s32 0, %v548
    %v550 = vrot.slane %v545, %v549
    %v553 = vsel %vm261, %v535, 0
    %v556 = vsel %vm261, %v536, 0
    %558 = vmatprep.subr.mxu0 0.0
    %559 = vmatpush1.msra.mxu0 %v537
    %560 = vmatprep.subr.mxu0 0.0
    %561 = vmatpush1.msra.mxu0 %v538
    %562 = vmatprep.subr.mxu0 0.0
    %563 = vmatpush1.msra.mxu0 %v539
    %564 = vmatprep.subr.mxu0 0.0
    %565 = vmatpush1.msra.mxu0 %v540
    %566 = vmatprep.subr.mxu0 0.0
    %567 = vmatpush1.msra.mxu0 %v541
    %568 = vmatprep.subr.mxu0 0.0
    %569 = vmatpush1.msra.mxu0 %v542
    %570 = vmatprep.subr.mxu0 0.0
    %571 = vmatpush1.msra.mxu0 %v543
    %572 = vmatprep.subr.mxu0 0.0
    %573 = vmatpush1.msra.mxu0 %v544
    %574 = vmatprep.subr.mxu0 0.0
    %575 = vmatpush1.msra.mxu0 0.0
    %576 = vmatprep.subr.mxu0 0.0
    %577 = vmatpush1.msra.mxu0 0.0
    %578 = vmatprep.subr.mxu0 0.0
    %579 = vmatpush1.msra.mxu0 0.0
    %580 = vmatprep.subr.mxu0 0.0
    %581 = vmatpush1.msra.mxu0 0.0
    %582 = vmatprep.subr.mxu0 0.0
    %583 = vmatpush1.msra.mxu0 0.0
    %584 = vmatprep.subr.mxu0 0.0
    %585 = vmatpush1.msra.mxu0 0.0
    %586 = vmatprep.subr.mxu0 0.0
    %587 = vmatpush1.msra.mxu0 0.0
    %588 = vmatprep.subr.mxu0 0.0
    %589 = vmatpush1.msra.mxu0 0.0
    %590 = vmatprep.subr.mxu0 0.0
    %591 = vmatpush1.msra.mxu0 0.0
    %592 = vmatprep.subr.mxu0 0.0
    %593 = vmatpush1.msra.mxu0 0.0
    %594 = vmatprep.subr.mxu0 0.0
    %595 = vmatpush1.msra.mxu0 0.0
    %596 = vmatprep.subr.mxu0 0.0
    %597 = vmatpush1.msra.mxu0 0.0
    %598 = vmatprep.subr.mxu0 0.0
    %599 = vmatpush1.msra.mxu0 0.0
    %600 = vmatprep.subr.mxu0 0.0
    %601 = vmatpush1.msra.mxu0 0.0
    %602 = vmatprep.subr.mxu0 0.0
    %603 = vmatpush1.msra.mxu0 0.0
    %604 = vmatprep.subr.mxu0 0.0
    %605 = vmatpush1.msra.mxu0 0.0
    %606 = vmatprep.subr.mxu0 0.0
    %607 = vmatpush1.msra.mxu0 0.0
    %608 = vmatprep.subr.mxu0 0.0
    %609 = vmatpush1.msra.mxu0 0.0
    %610 = vmatprep.subr.mxu0 0.0
    %611 = vmatpush1.msra.mxu0 0.0
    %612 = vmatprep.subr.mxu0 0.0
    %613 = vmatpush1.msra.mxu0 0.0
    %614 = vmatprep.subr.mxu0 0.0
    %615 = vmatpush1.msra.mxu0 0.0
    %616 = vmatprep.subr.mxu0 0.0
    %617 = vmatpush1.msra.mxu0 0.0
    %618 = vmatprep.subr.mxu0 0.0
    %619 = vmatpush1.msra.mxu0 0.0
    %620 = vmatprep.subr.mxu0 0.0
    %621 = vmatpush1.msra.mxu0 0.0
    %622 = vmatprep.mubr.f32.mxu0 0.0
    %623 = vmatmul.mubr.f32.gmra.mrb[0].mxu0 %v553
    %v624 = vpop.f32.mrb[0].mxu0
    %v625 = vadd.f32 %v550, %v624
    %v626 = vpop.f32.mrb[0].mxu0
    %627 = vmatprep.mubr.f32.mxu0 0.0
    %628 = vmatmul.mubr.f32.gmra.mrb[0].mxu0 %v556
    %v629 = vpop.f32.mrb[0].mxu0
    %v630 = vadd.f32 %v550, %v629
    %v631 = vpop.f32.mrb[0].mxu0
    %632 = vdwg.mxu0
    %v633 = vmax.f32 %v625, 0.0
    %v634 = vmax.f32 %v630, 0.0
    %v635 = vld [vmem:[%s13] sm:$0xff]
    %v636 = vld [vmem:[%s13 + $0x8] sm:$0xff]
    %v637 = vld [vmem:[%s13 + $0x10] sm:$0xff]
    %v638 = vld [vmem:[%s13 + $0x18] sm:$0xff]
    %v639 = vld [vmem:[%s14] sm:$0x1]
    %v641 = vlaneseq
    %v642 = vshrl.u32 %v641, 7
    %v643 = vsub.s32 0, %v642
    %v644 = vrot.slane %v639, %v643
    %vm646 = vcmask 261120
    %v648 = vsel %vm646, %v633, 0
    %v651 = vsel %vm646, %v634, 0
    %653 = vmatprep.subr.mxu0 0.0
    %654 = vmatpush1.msra.mxu0 %v635
    %655 = vmatprep.subr.mxu0 0.0
    %656 = vmatpush1.msra.mxu0 %v636
    %657 = vmatprep.subr.mxu0 0.0
    %658 = vmatpush1.msra.mxu0 %v637
    %659 = vmatprep.subr.mxu0 0.0
    %660 = vmatpush1.msra.mxu0 %v638
    %661 = vmatprep.subr.mxu0 0.0
    %662 = vmatpush1.msra.mxu0 0.0
    %663 = vmatprep.subr.mxu0 0.0
    %664 = vmatpush1.msra.mxu0 0.0
    %665 = vmatprep.subr.mxu0 0.0
    %666 = vmatpush1.msra.mxu0 0.0
    %667 = vmatprep.subr.mxu0 0.0
    %668 = vmatpush1.msra.mxu0 0.0
    %669 = vmatprep.subr.mxu0 0.0
    %670 = vmatpush1.msra.mxu0 0.0
    %671 = vmatprep.subr.mxu0 0.0
    %672 = vmatpush1.msra.mxu0 0.0
    %673 = vmatprep.subr.mxu0 0.0
    %674 = vmatpush1.msra.mxu0 0.0
    %675 = vmatprep.subr.mxu0 0.0
    %676 = vmatpush1.msra.mxu0 0.0
    %677 = vmatprep.subr.mxu0 0.0
    %678 = vmatpush1.msra.mxu0 0.0
    %679 = vmatprep.subr.mxu0 0.0
    %680 = vmatpush1.msra.mxu0 0.0
    %681 = vmatprep.subr.mxu0 0.0
    %682 = vmatpush1.msra.mxu0 0.0
    %683 = vmatprep.subr.mxu0 0.0
    %684 = vmatpush1.msra.mxu0 0.0
    %685 = vmatprep.subr.mxu0 0.0
    %686 = vmatpush1.msra.mxu0 0.0
    %687 = vmatprep.subr.mxu0 0.0
    %688 = vmatpush1.msra.mxu0 0.0
    %689 = vmatprep.subr.mxu0 0.0
    %690 = vmatpush1.msra.mxu0 0.0
    %691 = vmatprep.subr.mxu0 0.0
    %692 = vmatpush1.msra.mxu0 0.0
    %693 = vmatprep.subr.mxu0 0.0
    %694 = vmatpush1.msra.mxu0 0.0
    %695 = vmatprep.subr.mxu0 0.0
    %696 = vmatpush1.msra.mxu0 0.0
    %697 = vmatprep.subr.mxu0 0.0
    %698 = vmatpush1.msra.mxu0 0.0
    %699 = vmatprep.subr.mxu0 0.0
    %700 = vmatpush1.msra.mxu0 0.0
    %701 = vmatprep.subr.mxu0 0.0
    %702 = vmatpush1.msra.mxu0 0.0
    %703 = vmatprep.subr.mxu0 0.0
    %704 = vmatpush1.msra.mxu0 0.0
    %705 = vmatprep.subr.mxu0 0.0
    %706 = vmatpush1.msra.mxu0 0.0
    %707 = vmatprep.subr.mxu0 0.0
    %708 = vmatpush1.msra.mxu0 0.0
    %709 = vmatprep.subr.mxu0 0.0
    %710 = vmatpush1.msra.mxu0 0.0
    %711 = vmatprep.subr.mxu0 0.0
    %712 = vmatpush1.msra.mxu0 0.0
    %713 = vmatprep.subr.mxu0 0.0
    %714 = vmatpush1.msra.mxu0 0.0
    %715 = vmatprep.subr.mxu0 0.0
    %716 = vmatpush1.msra.mxu0 0.0
    %717 = vmatprep.mubr.f32.mxu0 0.0
    %718 = vmatmul.mubr.f32.gmra.mrb[0].mxu0 %v648
    %v719 = vpop.f32.mrb[0].mxu0
    %v720 = vadd.f32 %v644, %v719
    %v721 = vpop.f32.mrb[0].mxu0
    %722 = vmatprep.mubr.f32.mxu0 0.0
    %723 = vmatmul.mubr.f32.gmra.mrb[0].mxu0 %v651
    %v724 = vpop.f32.mrb[0].mxu0
    %v725 = vadd.f32 %v644, %v724
    %v726 = vpop.f32.mrb[0].mxu0
    %727 = vdwg.mxu0
    %728 = vst.msk [vmem:[#allocation2] sm:$0xff] %vm62, %v720
    %729 = vst.msk [vmem:[#allocation2 + $0x8] sm:$0xff] %vm62, %v725
    // Predicated region
    $region62: #{tpu_custom_call.1} parent=1 // pred_check
      _
    $region63: #{tpu_custom_call.1} parent=1 // pred_check_branch
      %731 = sbr.rel (0) target = $region65
    $region64: #{tpu_custom_call.1} parent=1 // pred_region
      %s733 = ssub.s32 256, 256
      %734 = vsyncadd [#allocation3], %s733
      %s735 = sshll.u32 [#allocation2], 4
      %s736 = int_to_ptr.vmem [resolvable:$true] %s735
      %741 = dma.vmem_to_hbm [thread:$0]  %s736, 256, %s15, [#allocation3], 128, 128, 8
    $region65: #{tpu_custom_call.1} parent=1 // pred_fallthru
      _
    // Predicated region
    $region66: #{tpu_custom_call.1} parent=1 // pred_check
      _
    $region67: #{tpu_custom_call.1} parent=1 // pred_check_branch
      %743 = sbr.rel (0) target = $region69
    $region68: #{tpu_custom_call.1} parent=1 // pred_region
      %744 = dma.done [#allocation3], 256
    $region69: #{tpu_custom_call.1} parent=1 // pred_fallthru
      _
    %745 = vsyncpa [#allocation3], 1

</llo_original>
